<compile_context>
chip_gen: v5e
topology: v5e:2x2
jax: 0.10.0
libtpu: 0.0.40
codegen_flags: <defaults>
</compile_context>

<pallas_src>
import functools

import jax
import jax.numpy as jnp
import numpy as np
from jax.experimental import pallas as pl
from jax.experimental.pallas import tpu as pltpu

# Hyper-params from SigmoidCrossEntropyCenterness.default_hyper_params
BACKGROUND = 0.0
WEIGHT = 1.0

_LANES = 128
_TILE_ROWS = 2048   # (2048, 128) f32 block = 1 MiB per input per buffer
_MAX_OUTER = 8      # outer 'parallel' axis; sharded across TensorCores on v7x


def _round_up(x, m):
    return (x + m - 1) // m * m


def _centerness_kernel(pred_ref, label_ref, loss_ref, cnt_ref, *,
                       n_inner, tile_rows, total_rows, mask_rows):
    """One (tile_rows, 128) tile: elementwise loss, fold to (8,128) partials.

    loss_ref / cnt_ref: (8, 128) output blocks, revisited (accumulated) across
    the inner grid axis; one pair per outer chunk.
    """
    inner = pl.program_id(1)

    @pl.when(inner == 0)
    def _():
        loss_ref[...] = jnp.zeros_like(loss_ref)
        cnt_ref[...] = jnp.zeros_like(cnt_ref)

    pred = pred_ref[...]
    label = label_ref[...]

    # Foreground mask = (label != background); optionally AND with row
    # validity when the tiling overshoots the true row count (ragged tail /
    # duplicated clamp tiles read garbage that must not contribute).
    fg = label != BACKGROUND
    if mask_rows:
        outer = pl.program_id(0)
        tile_idx = outer * n_inner + inner
        row_ids = tile_idx * tile_rows + jax.lax.broadcasted_iota(
            jnp.int32, (tile_rows, _LANES), 0)
        fg = fg & (row_ids < total_rows)

    # F.binary_cross_entropy_with_logits, stable form:
    #   max(x, 0) - x*y + log(1 + exp(-|x|))
    bce_logits = (jnp.maximum(pred, 0.0) - pred * label
                  + jnp.log1p(jnp.exp(-jnp.abs(pred))))

    # F.binary_cross_entropy(label, label) = -(y*log y + (1-y)*log(1-y));
    # PyTorch clamps the logs at -100.  Kept in f32 for exact parity with the
    # reference (bf16 logs would trim EUP load on v7x at some accuracy cost).
    log_l = jnp.maximum(jnp.log(label), -100.0)
    log_1ml = jnp.maximum(jnp.log(1.0 - label), -100.0)
    entropy = -(label * log_l + (1.0 - label) * log_1ml)

    elem = jnp.where(fg, bce_logits - entropy, 0.0)
    msk = fg.astype(jnp.float32)

    # Fold (tile_rows, 128) -> (8, 128) with vreg-wise adds only (no per-step
    # cross-lane/sublane XLU reduce, no serializing scalar carry).
    loss_ref[...] += jnp.sum(elem.reshape(tile_rows // 8, 8, _LANES), axis=0)
    cnt_ref[...] += jnp.sum(msk.reshape(tile_rows // 8, 8, _LANES), axis=0)


@jax.jit
def sigmoid_cross_entropy_centerness(pred, label):
    """pred, label: (B, HW) float32 -> scalar float32 loss."""
    if pred.dtype != jnp.float32:
        pred = pred.astype(jnp.float32)
    if label.dtype != jnp.float32:
        label = label.astype(jnp.float32)

    n = pred.size
    flat_pred = pred.reshape(-1)
    flat_label = label.reshape(-1)

    # Lane-align the flat length.  When B*HW is already a multiple of 128
    # (common case) this is a free reshape with NO HBM copy; otherwise pad by
    # < 128 elements (plus a floor of 8 rows so blocks are legal (8k, 128)
    # tiles).  Padded labels are 0 == background, so they contribute nothing.
    padded_n = max(_round_up(n, _LANES), 8 * _LANES)
    if padded_n != n:
        flat_pred = jnp.pad(flat_pred, (0, padded_n - n))
        flat_label = jnp.pad(flat_label, (0, padded_n - n))
    rows = padded_n // _LANES
    pred2 = flat_pred.reshape(rows, _LANES)
    label2 = flat_label.reshape(rows, _LANES)

    tile_rows = min(_TILE_ROWS, _round_up(rows, 8))
    n_row_tiles = pl.cdiv(rows, tile_rows)
    n_outer = min(_MAX_OUTER, n_row_tiles)
    n_inner = pl.cdiv(n_row_tiles, n_outer)
    max_tile = n_row_tiles - 1
    # Row masking only needed if the last tile is ragged or the outer/inner
    # split overshoots the true tile count.
    mask_rows = (n_row_tiles * tile_rows != rows) or (n_outer * n_inner != n_row_tiles)

    def in_map(o, i):
        # Clamp overshoot tiles to a valid block (they are fully masked
        # in-kernel, so the duplicated data never contributes).
        return (jnp.minimum(o * n_inner + i, max_tile), 0)

    kernel = functools.partial(
        _centerness_kernel,
        n_inner=n_inner, tile_rows=tile_rows, total_rows=rows,
        mask_rows=mask_rows)

    loss_parts, cnt_parts = pl.pallas_call(
        kernel,
        out_shape=(
            jax.ShapeDtypeStruct((8 * n_outer, _LANES), jnp.float32),
            jax.ShapeDtypeStruct((8 * n_outer, _LANES), jnp.float32),
        ),
        grid_spec=pltpu.PrefetchScalarGridSpec(
            num_scalar_prefetch=0,
            grid=(n_outer, n_inner),
            in_specs=[
                pl.BlockSpec((tile_rows, _LANES), in_map),
                pl.BlockSpec((tile_rows, _LANES), in_map),
            ],
            out_specs=[
                pl.BlockSpec((8, _LANES), lambda o, i: (o, 0)),
                pl.BlockSpec((8, _LANES), lambda o, i: (o, 0)),
            ],
        ),
        compiler_params=pltpu.CompilerParams(
            dimension_semantics=("parallel", "arbitrary")),
    )(pred2, label2)

    # Final tiny reduction + normalization in the wrapper
    # (matches loss.sum() / torch.max(mask.sum(), t_one) * weight).
    loss_sum = jnp.sum(loss_parts)
    mask_sum = jnp.sum(cnt_parts)
    return loss_sum / jnp.maximum(mask_sum, 1.0) * jnp.float32(WEIGHT)


def _reference(pred, label):
    """Pure-JAX reference mirroring the PyTorch forward."""
    pred = pred.astype(jnp.float32)
    label = label.astype(jnp.float32)
    mask = (label != BACKGROUND).astype(jnp.float32)
    bce_logits = (jnp.maximum(pred, 0.0) - pred * label
                  + jnp.log1p(jnp.exp(-jnp.abs(pred))))
    log_l = jnp.maximum(jnp.log(label), -100.0)
    log_1ml = jnp.maximum(jnp.log(1.0 - label), -100.0)
    bce_res = -(label * log_l + (1.0 - label) * log_1ml)
    loss = (bce_logits - bce_res) * mask
    return loss.sum() / jnp.maximum(mask.sum(), 1.0) * WEIGHT


if __name__ == "__main__":
    key = jax.random.PRNGKey(0)
    k1, k2, k3 = jax.random.split(key, 3)

    B, H, W = 2, 16, 16
    HW = H * W

    # pred: centerness logits (BEFORE sigmoid), (B, HW)
    pred = jax.random.normal(k1, (B, HW), dtype=jnp.float32)
    # label: centerness targets in [0, 1]; ~30% are background (exactly 0)
    label = jax.random.uniform(k2, (B, HW), dtype=jnp.float32)
    keep = (jax.random.uniform(k3, (B, HW)) > 0.3).astype(jnp.float32)
    label = label * keep

    out = sigmoid_cross_entropy_centerness(pred, label)
    out = jax.block_until_ready(out)

    ref = _reference(pred, label)
    np.testing.assert_allclose(np.asarray(out), np.asarray(ref),
                               rtol=1e-5, atol=1e-5)

    print("KERNEL_OK")
</pallas_src>

<mosaic_0001>
module attributes {stable_mosaic.version = 11 : i64} {
  func.func @_centerness_kernel(%arg0: i32, %arg1: i32, %arg2: memref<8x128xf32, #tpu.memory_space<vmem>>, %arg3: memref<8x128xf32, #tpu.memory_space<vmem>>, %arg4: memref<8x128xf32, #tpu.memory_space<vmem>>, %arg5: memref<8x128xf32, #tpu.memory_space<vmem>>) attributes {dimension_semantics = [#tpu.dimension_semantics<parallel>, #tpu.dimension_semantics<arbitrary>], iteration_bounds = array<i64: 1, 1>, scalar_prefetch = 0 : i64, scratch_operands = 0 : i64, tpu.core_type = #tpu.core_type<tc>, window_params = [{transform_indices = @transform_0, window_bounds = array<i64: 8, 128>}, {transform_indices = @transform_1, window_bounds = array<i64: 8, 128>}, {transform_indices = @transform_2, window_bounds = array<i64: 8, 128>}, {transform_indices = @transform_3, window_bounds = array<i64: 8, 128>}]} {
    %c0_i32 = arith.constant 0 : i32
    %0 = arith.cmpi eq, %arg1, %c0_i32 : i32
    %1 = arith.extui %0 : i1 to i32
    %c0_i32_0 = arith.constant 0 : i32
    %2 = arith.cmpi ne, %1, %c0_i32_0 : i32
    scf.if %2 {
      %cst_22 = arith.constant 0.000000e+00 : f32
      %47 = vector.broadcast %cst_22 : f32 to vector<8x128xf32>
      %c0_23 = arith.constant 0 : index
      %c0_24 = arith.constant 0 : index
      %48 = vector.load %arg4[%c0_23, %c0_24] : memref<8x128xf32, #tpu.memory_space<vmem>>, vector<8x128xf32>
      tpu.vector_store %arg4[%c0_23, %c0_24], %47 {strides = array<i32>} : memref<8x128xf32, #tpu.memory_space<vmem>>, vector<8x128xf32>,
      %cst_25 = arith.constant 0.000000e+00 : f32
      %49 = vector.broadcast %cst_25 : f32 to vector<8x128xf32>
      %c0_26 = arith.constant 0 : index
      %c0_27 = arith.constant 0 : index
      %50 = vector.load %arg5[%c0_26, %c0_27] : memref<8x128xf32, #tpu.memory_space<vmem>>, vector<8x128xf32>
      tpu.vector_store %arg5[%c0_26, %c0_27], %49 {strides = array<i32>} : memref<8x128xf32, #tpu.memory_space<vmem>>, vector<8x128xf32>,
    } else {
    }
    %c0 = arith.constant 0 : index
    %c0_1 = arith.constant 0 : index
    %3 = vector.load %arg2[%c0, %c0_1] : memref<8x128xf32, #tpu.memory_space<vmem>>, vector<8x128xf32>
    %c0_2 = arith.constant 0 : index
    %c0_3 = arith.constant 0 : index
    %4 = vector.load %arg3[%c0_2, %c0_3] : memref<8x128xf32, #tpu.memory_space<vmem>>, vector<8x128xf32>
    %cst = arith.constant 0.000000e+00 : f32
    %5 = vector.broadcast %cst : f32 to vector<8x128xf32>
    %6 = arith.cmpf one, %4, %5 : vector<8x128xf32>
    %cst_4 = arith.constant 0.000000e+00 : f32
    %7 = vector.broadcast %cst_4 : f32 to vector<8x128xf32>
    %8 = arith.maximumf %3, %7 : vector<8x128xf32>
    %9 = arith.mulf %3, %4 : vector<8x128xf32>
    %10 = arith.subf %8, %9 : vector<8x128xf32>
    %11 = math.absf %3 : vector<8x128xf32>
    %cst_5 = arith.constant 0.000000e+00 : f32
    %12 = vector.broadcast %cst_5 : f32 to vector<8x128xf32>
    %13 = arith.subf %12, %11 : vector<8x128xf32>
    %14 = math.exp %13 : vector<8x128xf32>
    %15 = math.log1p %14 : vector<8x128xf32>
    %16 = arith.addf %10, %15 : vector<8x128xf32>
    %17 = math.log %4 : vector<8x128xf32>
    %cst_6 = arith.constant -1.000000e+02 : f32
    %18 = vector.broadcast %cst_6 : f32 to vector<8x128xf32>
    %19 = arith.maximumf %17, %18 : vector<8x128xf32>
    %cst_7 = arith.constant 1.000000e+00 : f32
    %20 = vector.broadcast %cst_7 : f32 to vector<8x128xf32>
    %21 = arith.subf %20, %4 : vector<8x128xf32>
    %22 = math.log %21 : vector<8x128xf32>
    %cst_8 = arith.constant -1.000000e+02 : f32
    %23 = vector.broadcast %cst_8 : f32 to vector<8x128xf32>
    %24 = arith.maximumf %22, %23 : vector<8x128xf32>
    %25 = arith.mulf %4, %19 : vector<8x128xf32>
    %cst_9 = arith.constant 1.000000e+00 : f32
    %26 = vector.broadcast %cst_9 : f32 to vector<8x128xf32>
    %27 = arith.subf %26, %4 : vector<8x128xf32>
    %28 = arith.mulf %27, %24 : vector<8x128xf32>
    %29 = arith.addf %25, %28 : vector<8x128xf32>
    %cst_10 = arith.constant 0.000000e+00 : f32
    %30 = vector.broadcast %cst_10 : f32 to vector<8x128xf32>
    %31 = arith.subf %30, %29 : vector<8x128xf32>
    %32 = arith.subf %16, %31 : vector<8x128xf32>
    %cst_11 = arith.constant 0.000000e+00 : f32
    %33 = vector.broadcast %cst_11 : f32 to vector<8x128xf32>
    %34 = arith.select %6, %32, %33 : vector<8x128xi1>, vector<8x128xf32>
    %35 = arith.extui %6 : vector<8x128xi1> to vector<8x128xi32>
    %36 = arith.sitofp %35 : vector<8x128xi32> to vector<8x128xf32>
    %c0_12 = arith.constant 0 : index
    %c0_13 = arith.constant 0 : index
    %37 = vector.load %arg4[%c0_12, %c0_13] : memref<8x128xf32, #tpu.memory_space<vmem>>, vector<8x128xf32>
    %38 = vector.shape_cast %34 : vector<8x128xf32> to vector<1x8x128xf32>
    %cst_14 = arith.constant dense<0.000000e+00> : vector<8x128xf32>
    %39 = vector.multi_reduction <add>, %38, %cst_14 [0] : vector<1x8x128xf32> to vector<8x128xf32>
    %40 = arith.addf %37, %39 : vector<8x128xf32>
    %c0_15 = arith.constant 0 : index
    %c0_16 = arith.constant 0 : index
    %41 = vector.load %arg4[%c0_15, %c0_16] : memref<8x128xf32, #tpu.memory_space<vmem>>, vector<8x128xf32>
    tpu.vector_store %arg4[%c0_15, %c0_16], %40 {strides = array<i32>} : memref<8x128xf32, #tpu.memory_space<vmem>>, vector<8x128xf32>,
    %c0_17 = arith.constant 0 : index
    %c0_18 = arith.constant 0 : index
    %42 = vector.load %arg5[%c0_17, %c0_18] : memref<8x128xf32, #tpu.memory_space<vmem>>, vector<8x128xf32>
    %43 = vector.shape_cast %36 : vector<8x128xf32> to vector<1x8x128xf32>
    %cst_19 = arith.constant dense<0.000000e+00> : vector<8x128xf32>
    %44 = vector.multi_reduction <add>, %43, %cst_19 [0] : vector<1x8x128xf32> to vector<8x128xf32>
    %45 = arith.addf %42, %44 : vector<8x128xf32>
    %c0_20 = arith.constant 0 : index
    %c0_21 = arith.constant 0 : index
    %46 = vector.load %arg5[%c0_20, %c0_21] : memref<8x128xf32, #tpu.memory_space<vmem>>, vector<8x128xf32>
    tpu.vector_store %arg5[%c0_20, %c0_21], %45 {strides = array<i32>} : memref<8x128xf32, #tpu.memory_space<vmem>>, vector<8x128xf32>,
    return
  }
  func.func @transform_0(%arg0: i32, %arg1: i32) -> (i32, i32) {
    %c1_i32 = arith.constant 1 : i32
    %0 = arith.muli %arg0, %c1_i32 : i32
    %1 = arith.addi %0, %arg1 : i32
    %c0_i32 = arith.constant 0 : i32
    %2 = arith.minsi %1, %c0_i32 : i32
    %c0_i32_0 = arith.constant 0 : i32
    %c0_i32_1 = arith.constant 0 : i32
    return %2, %c0_i32_0 : i32, i32
  }
  func.func @transform_1(%arg0: i32, %arg1: i32) -> (i32, i32) {
    %c1_i32 = arith.constant 1 : i32
    %0 = arith.muli %arg0, %c1_i32 : i32
    %1 = arith.addi %0, %arg1 : i32
    %c0_i32 = arith.constant 0 : i32
    %2 = arith.minsi %1, %c0_i32 : i32
    %c0_i32_0 = arith.constant 0 : i32
    %c0_i32_1 = arith.constant 0 : i32
    return %2, %c0_i32_0 : i32, i32
  }
  func.func @transform_2(%arg0: i32, %arg1: i32) -> (i32, i32) {
    %c0_i32 = arith.constant 0 : i32
    %c0_i32_0 = arith.constant 0 : i32
    return %arg0, %c0_i32 : i32, i32
  }
  func.func @transform_3(%arg0: i32, %arg1: i32) -> (i32, i32) {
    %c0_i32 = arith.constant 0 : i32
    %c0_i32_0 = arith.constant 0 : i32
    return %arg0, %c0_i32 : i32, i32
  }
}

</mosaic_0001>

<llo_original>
// kernel: sigmoid_cross_entropy_centerness.1
$region0: #{sigmoid_cross_entropy_centerness.1}
  #allocation0 [shape = 'u32[]', space=smem, size = 0x4, offset = 0x4, fixed_abs, tag = 'smem constant byte address 0x4 - core index']
  #allocation1 [shape = 'u32[72,128]{1,0:T(1,128)}', space=vmem, size = 0x9000, scoped, tag = 'internal scratch']
  %s0 = inlined_call_operand.vmem [shape: f32[8,128], index: 0, kind: input, shape index: {}]
  %s1 = inlined_call_operand.vmem [shape: f32[8,128], index: 1, kind: input, shape index: {}]
  %s2 = inlined_call_operand.vmem [shape: f32[8,128], index: 2, kind: output, shape index: {0}]
  %s3 = inlined_call_operand.vmem [shape: f32[8,128], index: 3, kind: output, shape index: {1}]
  %4 = xla_tuple %s2, %s3
  %s5 = sld [smem:[#allocation0]]
  $region30: #{sigmoid_cross_entropy_centerness.1} parent=0
    _
  %s7 = ssub.s32 1, %s5
  %s8 = scalar_select 0, %s7, %s5
  // Predicated region
  $region2: #{sigmoid_cross_entropy_centerness.1} parent=0 // pred_check
    _
  $region3: #{sigmoid_cross_entropy_centerness.1} parent=0 // pred_check_branch
    %10 = sbr.rel (0) target = $region5
  $region4: #{sigmoid_cross_entropy_centerness.1} parent=0 // pred_region
    %s11 = sadd.s32 0, 0
    %p12 = scmp.lt.s32.totalorder %s11, 0
    %s13 = scalar_select %p12, %s11, 0
    %p14 = scmp.lt.s32.totalorder %s13, 0
    %s15 = scalar_select %p14, %s13, 0
    %s16 = smul.addr %s15, 8
    %s17 = scalar_lea.vmem %s0, %s16
    %s18 = sadd.s32 0, 0
    %p19 = scmp.lt.s32.totalorder %s18, 0
    %s20 = scalar_select %p19, %s18, 0
  $region5: #{sigmoid_cross_entropy_centerness.1} parent=0 // pred_fallthru
    _
  // Predicated region
  $region6: #{sigmoid_cross_entropy_centerness.1} parent=0 // pred_check
    _
  $region7: #{sigmoid_cross_entropy_centerness.1} parent=0 // pred_check_branch
    %22 = sbr.rel (0) target = $region9
  $region8: #{sigmoid_cross_entropy_centerness.1} parent=0 // pred_region
    %s23 = sadd.s32 0, 0
    %p24 = scmp.lt.s32.totalorder %s23, 0
    %s25 = scalar_select %p24, %s23, 0
    %p26 = scmp.lt.s32.totalorder %s25, 0
    %s27 = scalar_select %p26, %s25, 0
    %s28 = smul.addr %s27, 8
    %s29 = scalar_lea.vmem %s1, %s28
    %s30 = sadd.s32 0, 0
    %p31 = scmp.lt.s32.totalorder %s30, 0
    %s32 = scalar_select %p31, %s30, 0
  $region9: #{sigmoid_cross_entropy_centerness.1} parent=0 // pred_fallthru
    _
  %s33 = sadd.s32 0, 0
  %p34 = scmp.lt.s32.totalorder %s33, 0
  %s35 = scalar_select %p34, %s33, 0
  %p36 = scmp.lt.s32.totalorder %s35, 0
  %s37 = scalar_select %p36, %s35, 0
  %s38 = smul.addr %s37, 8
  %s39 = scalar_lea.vmem %s0, %s38
  %s40 = sadd.s32 0, 0
  %p41 = scmp.lt.s32.totalorder %s40, 0
  %s42 = scalar_select %p41, %s40, 0
  %p43 = scmp.lt.s32.totalorder %s42, 0
  %s44 = scalar_select %p43, %s42, 0
  %s45 = smul.addr %s44, 8
  %s46 = scalar_lea.vmem %s1, %s45
  %s47 = sadd.s32 0, 0
  %p48 = scmp.lt.s32.totalorder %s47, 0
  %s49 = scalar_select %p48, %s47, 0
  %p50 = scmp.lt.s32.totalorder %s49, 0
  %s51 = scalar_select %p50, %s49, 0
  %s52 = smul.addr %s51, 8
  %s53 = scalar_lea.vmem %s0, %s52
  %s54 = sadd.s32 0, 0
  %p55 = scmp.lt.s32.totalorder %s54, 0
  %s56 = scalar_select %p55, %s54, 0
  %s57 = sadd.s32 0, 0
  %p58 = scmp.lt.s32.totalorder %s57, 0
  %s59 = scalar_select %p58, %s57, 0
  %p60 = scmp.lt.s32.totalorder %s59, 0
  %s61 = scalar_select %p60, %s59, 0
  %s62 = smul.addr %s61, 8
  %s63 = scalar_lea.vmem %s1, %s62
  %s64 = sadd.s32 0, 0
  %p65 = scmp.lt.s32.totalorder %s64, 0
  %s66 = scalar_select %p65, %s64, 0
  %p67 = scmp.eq.s32.totalorder 0, 0
  // Predicated region
  $region10: #{sigmoid_cross_entropy_centerness.1} parent=0 // pred_check
    %p68 = pneg %p67
  $region11: #{sigmoid_cross_entropy_centerness.1} parent=0 // pred_check_branch
    %70 = sbr.rel (%p68) target = $region13
  $region12: #{sigmoid_cross_entropy_centerness.1} parent=0 // pred_region
    %71 = vst [vmem:[%s2] sm:$0xff] 0.0
    %72 = vst [vmem:[%s3] sm:$0xff] 0.0
  $region13: #{sigmoid_cross_entropy_centerness.1} parent=0 // pred_fallthru
    _
  %v73 = vld [vmem:[%s53] sm:$0xff]
  %v74 = vld [vmem:[%s63] sm:$0xff]
  %vm75 = vcmp.ne.f32.partialorder %v74, 0.0
  %v76 = vmax.f32 %v73, 0.0
  %v77 = vmul.f32 %v73, %v74
  %v78 = vsub.f32 %v76, %v77
  %v79 = vand.u32 2147483647, %v73
  %v80 = vsub.f32 0.0, %v79
  %v81 = vmul.f32 %v80, 1.442695
  %v82 = vpow.pop %v81
  %v83 = vadd.f32 %v82, 1.0
  %v84 = vlog2.pop %v83
  %v85 = vmul.f32 %v84, 0.6931472
  %v86 = vmul.f32 -0.5, %v82
  %v87 = vadd.f32 %v86, 1.0
  %v88 = vmul.f32 %v87, %v82
  %v89 = vand.u32 2147483647, %v82
  %vm90 = vcmp.lt.f32.partialorder %v89, 0.0004427343
  %v91 = vsel %vm90, %v88, %v85
  %v92 = vadd.f32 %v78, %v91
  %v93 = vlog2.pop %v74
  %v94 = vmul.f32 %v93, 0.6931472
  %v95 = vmax.f32 %v94, -100.0
  %v96 = vsub.f32 1.0, %v74
  %v97 = vlog2.pop %v96
  %v98 = vmul.f32 %v97, 0.6931472
  %v99 = vmax.f32 %v98, -100.0
  %v100 = vmul.f32 %v74, %v95
  %v101 = vmul.f32 %v96, %v99
  %v102 = vadd.f32 %v100, %v101
  %v103 = vsub.f32 0.0, %v102
  %v104 = vsub.f32 %v92, %v103
  %v105 = vsel %vm75, %v104, 0.0
  %v106 = vsel %vm75, 1, 0
  %v107 = vcvt.s32.f32 %v106
  %v108 = vld [vmem:[%s2] sm:$0xff]
  %v109 = vadd.f32 %v105, 0.0
  %v110 = vadd.f32 %v108, %v109
  %111 = vst [vmem:[%s2] sm:$0xff] %v110
  %v112 = vld [vmem:[%s3] sm:$0xff]
  %v113 = vadd.f32 %v107, 0.0
  %v114 = vadd.f32 %v112, %v113
  %115 = vst [vmem:[%s3] sm:$0xff] %v114
  // Predicated region
  $region14: #{sigmoid_cross_entropy_centerness.1} parent=0 // pred_check
    _
  $region15: #{sigmoid_cross_entropy_centerness.1} parent=0 // pred_check_branch
    %117 = sbr.rel (0) target = $region17
  $region16: #{sigmoid_cross_entropy_centerness.1} parent=0 // pred_region
    _
  $region17: #{sigmoid_cross_entropy_centerness.1} parent=0 // pred_fallthru
    _
  // Predicated region
  $region18: #{sigmoid_cross_entropy_centerness.1} parent=0 // pred_check
    _
  $region19: #{sigmoid_cross_entropy_centerness.1} parent=0 // pred_check_branch
    %119 = sbr.rel (0) target = $region21
  $region20: #{sigmoid_cross_entropy_centerness.1} parent=0 // pred_region
    _
  $region21: #{sigmoid_cross_entropy_centerness.1} parent=0 // pred_fallthru
    _
  // Predicated region
  $region22: #{sigmoid_cross_entropy_centerness.1} parent=0 // pred_check
    _
  $region23: #{sigmoid_cross_entropy_centerness.1} parent=0 // pred_check_branch
    %121 = sbr.rel (0) target = $region25
  $region24: #{sigmoid_cross_entropy_centerness.1} parent=0 // pred_region
    _
  $region25: #{sigmoid_cross_entropy_centerness.1} parent=0 // pred_fallthru
    _
  // Predicated region
  $region26: #{sigmoid_cross_entropy_centerness.1} parent=0 // pred_check
    _
  $region27: #{sigmoid_cross_entropy_centerness.1} parent=0 // pred_check_branch
    %123 = sbr.rel (0) target = $region29
  $region28: #{sigmoid_cross_entropy_centerness.1} parent=0 // pred_region
    _
  $region29: #{sigmoid_cross_entropy_centerness.1} parent=0 // pred_fallthru
    _

</llo_original>
